<compile_context>
chip_gen: v7x
topology: tpu7x:2x2x1
jax: 0.10.0
libtpu: 0.0.40
codegen_flags: <defaults>
</compile_context>

<pallas_src>
import math

import jax
import jax.numpy as jnp
from jax.experimental import pallas as pl
from jax.experimental.pallas import tpu as pltpu


def _round_up(n, m):
    return (n + m - 1) // m * m


def _cdiv(a, b):
    return -(-a // b)


def _ffn_kernel(x_ref, w1_ref, b1_ref, w2_ref, b2_ref, o_ref, acc_ref):
    """One (row_tile, ff_tile) grid step of the fused FFN.

    Grid = (row_tiles, ff_tiles); the ff axis is a reduction into acc_ref, so
    the (rows, d_ff) intermediate activation never touches HBM.
    """
    j = pl.program_id(1)

    # Matmuls in native dtype (bf16 MXU fast path); f32 accumulation.
    h = jnp.dot(x_ref[...], w1_ref[...], preferred_element_type=jnp.float32)
    # Bias + ReLU epilogue in f32 on the VPU.
    h = jnp.maximum(h + b1_ref[...].astype(jnp.float32), 0.0)
    # TODO(synk): nn.Dropout is identity in eval-mode forward; training-mode
    # stochastic dropout (pltpu.prng_seed / prng_random_bits) not implemented.
    partial = jnp.dot(h.astype(w2_ref.dtype), w2_ref[...],
                      preferred_element_type=jnp.float32)

    @pl.when(j == 0)
    def _():
        # First reduction step: write dot + b2 directly (no broadcast + RMW).
        acc_ref[...] = partial + b2_ref[...].astype(jnp.float32)

    @pl.when(j > 0)
    def _():
        acc_ref[...] += partial

    @pl.when(j == pl.num_programs(1) - 1)
    def _():
        o_ref[...] = acc_ref[...].astype(o_ref.dtype)


def _vmem_need_bytes(tile_rows, tile_ff, d_model_p, x_isz, w_isz, o_isz):
    """Conservative dtype-aware VMEM footprint for one tiling choice."""
    xb = 2 * tile_rows * d_model_p * x_isz          # x blocks (double-buffered)
    w1b = 2 * d_model_p * tile_ff * w_isz           # W1 blocks
    b1b = 2 * tile_ff * w_isz                       # b1 blocks
    w2b = 2 * tile_ff * d_model_p * w_isz           # W2 blocks
    b2b = 2 * d_model_p * w_isz                     # b2 blocks
    ob = 2 * tile_rows * d_model_p * o_isz          # out blocks
    acc = tile_rows * d_model_p * 4                 # f32 accumulator scratch
    hbuf = tile_rows * tile_ff * (4 + w_isz)        # f32 h + native-dtype copy
    return xb + w1b + b1b + w2b + b2b + ob + acc + hbuf


def _select_tiles(r, d_model_p, d_ff_p, x_isz, w_isz, o_isz, budget):
    """Pick (tile_rows, tile_ff) minimizing weight HBM traffic within budget."""
    r_cap = _round_up(r, 8)
    row_cands = sorted(
        {min(c, r_cap) for c in (4096, 2048, 1024, 512, 256, 128, 64, 32, 16, 8)},
        reverse=True)
    k = d_ff_p // 128
    ff_cands = [d * 128 for d in range(k, 0, -1) if k % d == 0]  # divisors, desc

    best_key, best_cfg = None, None
    for tf in ff_cands:
        for tr in row_cands:
            need = _vmem_need_bytes(tr, tf, d_model_p, x_isz, w_isz, o_isz)
            if need > budget:
                continue
            n_row = _cdiv(r, tr)
            # Weights are DMA'd once if fully resident along the ff axis
            # (block index constant across the whole grid), else once per
            # row tile (index_map depends on j, which wraps every row tile).
            weight_passes = 1 if tf == d_ff_p else n_row
            traffic = weight_passes * 2 * d_model_p * d_ff_p * w_isz
            steps = n_row * (d_ff_p // tf)
            key = (traffic, steps, -tr, -tf)
            if best_key is None or key < best_key:
                best_key, best_cfg = key, (tr, tf, need)
    if best_cfg is None:
        # Nothing fits the budget (very large d_model): smallest legal tiles.
        tr, tf = 8, 128
        best_cfg = (tr, tf,
                    _vmem_need_bytes(tr, tf, d_model_p, x_isz, w_isz, o_isz))
    return best_cfg


def feed_forward_block(x, w1, b1, w2, b2, *, tile_rows=None, tile_ff=None):
    """Fused relu(x @ W1 + b1) @ W2 + b2 (eval-mode dropout = identity).

    x: (..., d_model); w1: (d_model, d_ff); b1: (d_ff,);
    w2: (d_ff, d_model); b2: (d_model,).
    """
    orig_shape = x.shape
    d_model = orig_shape[-1]
    d_ff = w1.shape[1]
    assert w1.shape == (d_model, d_ff)
    assert b1.shape == (d_ff,)
    assert w2.shape == (d_ff, d_model)
    assert b2.shape == (d_model,)

    x2d = x.reshape(-1, d_model)
    r = x2d.shape[0]

    # Lane-dense padding: pad d_model / d_ff to multiples of 128 so every
    # block's lane axis is full-width (no masked stores, full MXU width).
    # Zero padding is exact: padded h columns are relu(0)=0 and padded W2
    # rows/cols are 0, so padded output columns are sliced off untouched.
    d_model_p = _round_up(d_model, 128)
    d_ff_p = _round_up(d_ff, 128)
    if d_model_p != d_model or d_ff_p != d_ff:
        x2d = jnp.pad(x2d, ((0, 0), (0, d_model_p - d_model)))
        w1 = jnp.pad(w1, ((0, d_model_p - d_model), (0, d_ff_p - d_ff)))
        b1 = jnp.pad(b1, ((0, d_ff_p - d_ff),))
        w2 = jnp.pad(w2, ((0, d_ff_p - d_ff), (0, d_model_p - d_model)))
        b2 = jnp.pad(b2, ((0, d_model_p - d_model),))

    x_isz = x2d.dtype.itemsize
    w_isz = w1.dtype.itemsize
    o_isz = x.dtype.itemsize

    # Generation-aware VMEM budget (v5e/v6e: 128 MiB; v7x: 64 MiB per TC).
    try:
        vmem_cap = int(pltpu.get_tpu_info().vmem_capacity_bytes)
    except Exception:
        vmem_cap = 64 * 2 ** 20  # conservative (v7x) fallback
    budget = int(vmem_cap * 0.70)

    auto_rows, auto_ff, _ = _select_tiles(
        r, d_model_p, d_ff_p, x_isz, w_isz, o_isz, budget)
    if tile_rows is None:
        tile_rows = auto_rows
    tile_rows = max(8, _round_up(min(tile_rows, _round_up(r, 8)), 8))
    if tile_ff is None:
        tile_ff = auto_ff
    assert d_ff_p % tile_ff == 0, "ff tile must evenly divide (padded) d_ff"

    need = _vmem_need_bytes(tile_rows, tile_ff, d_model_p, x_isz, w_isz, o_isz)
    vmem_limit_bytes = int(max(32 * 2 ** 20,
                               min(int(need * 1.5), int(vmem_cap * 0.92))))

    grid = (_cdiv(r, tile_rows), d_ff_p // tile_ff)

    b1_2d = b1.reshape(1, d_ff_p)
    b2_2d = b2.reshape(1, d_model_p)

    out = pl.pallas_call(
        _ffn_kernel,
        out_shape=jax.ShapeDtypeStruct((r, d_model_p), x.dtype),
        grid_spec=pltpu.PrefetchScalarGridSpec(
            num_scalar_prefetch=0,
            grid=grid,
            in_specs=[
                pl.BlockSpec((tile_rows, d_model_p), lambda i, j: (i, 0)),   # x
                pl.BlockSpec((d_model_p, tile_ff), lambda i, j: (0, j)),     # W1
                pl.BlockSpec((1, tile_ff), lambda i, j: (0, j)),             # b1
                pl.BlockSpec((tile_ff, d_model_p), lambda i, j: (j, 0)),     # W2
                pl.BlockSpec((1, d_model_p), lambda i, j: (0, 0)),           # b2
            ],
            out_specs=pl.BlockSpec((tile_rows, d_model_p), lambda i, j: (i, 0)),
            scratch_shapes=[pltpu.VMEM((tile_rows, d_model_p), jnp.float32)],
        ),
        compiler_params=pltpu.CompilerParams(
            dimension_semantics=("parallel", "arbitrary"),
            vmem_limit_bytes=vmem_limit_bytes,
        ),
    )(x2d, w1, b1_2d, w2, b2_2d)

    if d_model_p != d_model:
        out = out[:, :d_model]
    return out.reshape(orig_shape)


if __name__ == "__main__":
    key = jax.random.PRNGKey(0)
    k_x, k_w1, k_b1, k_w2, k_b2 = jax.random.split(key, 5)

    # Small shapes consistent with the module: batch=2, seq=8, d_model=32.
    B, S, d_model, d_ff = 2, 8, 32, 256

    x = jax.random.normal(k_x, (B, S, d_model), dtype=jnp.float32)

    # torch.nn.Linear-style init U(-1/sqrt(fan_in), 1/sqrt(fan_in)); weights
    # stored pre-transposed as (in, out) so the kernel computes x @ W.
    bound1 = 1.0 / math.sqrt(d_model)
    w1 = jax.random.uniform(k_w1, (d_model, d_ff), jnp.float32, -bound1, bound1)
    b1 = jax.random.uniform(k_b1, (d_ff,), jnp.float32, -bound1, bound1)
    bound2 = 1.0 / math.sqrt(d_ff)
    w2 = jax.random.uniform(k_w2, (d_ff, d_model), jnp.float32, -bound2, bound2)
    b2 = jax.random.uniform(k_b2, (d_model,), jnp.float32, -bound2, bound2)

    y = feed_forward_block(x, w1, b1, w2, b2)
    y = jax.block_until_ready(y)

    # Plain-JAX reference (eval mode: dropout is identity).
    ref = jnp.maximum(x @ w1 + b1, 0.0) @ w2 + b2
    assert y.shape == x.shape
    err = float(jnp.max(jnp.abs(y - ref)))
    assert jnp.allclose(y, ref, atol=1e-4, rtol=1e-4), err

    print("KERNEL_OK")
</pallas_src>

<mosaic_0001>
module attributes {stable_mosaic.version = 11 : i64} {
  func.func @_ffn_kernel(%arg0: i32, %arg1: i32, %arg2: memref<16x128xf32, #tpu.memory_space<vmem>>, %arg3: memref<128x256xf32, #tpu.memory_space<vmem>>, %arg4: memref<1x256xf32, #tpu.memory_space<vmem>>, %arg5: memref<256x128xf32, #tpu.memory_space<vmem>>, %arg6: memref<1x128xf32, #tpu.memory_space<vmem>>, %arg7: memref<16x128xf32, #tpu.memory_space<vmem>>, %arg8: memref<16x128xf32, #tpu.memory_space<vmem>>) attributes {dimension_semantics = [#tpu.dimension_semantics<parallel>, #tpu.dimension_semantics<arbitrary>], iteration_bounds = array<i64: 1, 1>, scalar_prefetch = 0 : i64, scratch_operands = 1 : i64, tpu.core_type = #tpu.core_type<tc>, window_params = [{transform_indices = @transform_0, window_bounds = array<i64: 16, 128>}, {transform_indices = @transform_1, window_bounds = array<i64: 128, 256>}, {transform_indices = @transform_2, window_bounds = array<i64: 1, 256>}, {transform_indices = @transform_3, window_bounds = array<i64: 256, 128>}, {pipeline_mode = #tpu.pipeline_mode<synchronous>, transform_indices = @transform_4, window_bounds = array<i64: 1, 128>}, {transform_indices = @transform_5, window_bounds = array<i64: 16, 128>}]} {
    %c0 = arith.constant 0 : index
    %c0_0 = arith.constant 0 : index
    %0 = vector.load %arg2[%c0, %c0_0] : memref<16x128xf32, #tpu.memory_space<vmem>>, vector<16x128xf32>
    %c0_1 = arith.constant 0 : index
    %c0_2 = arith.constant 0 : index
    %1 = vector.load %arg3[%c0_1, %c0_2] : memref<128x256xf32, #tpu.memory_space<vmem>>, vector<128x256xf32>
    %cst = arith.constant dense<0.000000e+00> : vector<16x256xf32>
    %2 = tpu.matmul %0, %1, %cst {dimension_numbers = #tpu.dot_dimension_numbers<[1], [0], [0], [1], [0, 0, 1, 1], [], []>} : vector<16x128xf32>, vector<128x256xf32>, vector<16x256xf32> -> vector<16x256xf32>
    %c0_3 = arith.constant 0 : index
    %c0_4 = arith.constant 0 : index
    %3 = vector.load %arg4[%c0_3, %c0_4] : memref<1x256xf32, #tpu.memory_space<vmem>>, vector<1x256xf32>
    %4 = vector.broadcast %3 : vector<1x256xf32> to vector<16x256xf32>
    %5 = arith.addf %2, %4 : vector<16x256xf32>
    %cst_5 = arith.constant 0.000000e+00 : f32
    %6 = vector.broadcast %cst_5 : f32 to vector<16x256xf32>
    %7 = arith.maximumf %5, %6 : vector<16x256xf32>
    %c0_6 = arith.constant 0 : index
    %c0_7 = arith.constant 0 : index
    %8 = vector.load %arg5[%c0_6, %c0_7] : memref<256x128xf32, #tpu.memory_space<vmem>>, vector<256x128xf32>
    %cst_8 = arith.constant dense<0.000000e+00> : vector<16x128xf32>
    %9 = tpu.matmul %7, %8, %cst_8 {dimension_numbers = #tpu.dot_dimension_numbers<[1], [0], [0], [1], [0, 0, 1, 1], [], []>} : vector<16x256xf32>, vector<256x128xf32>, vector<16x128xf32> -> vector<16x128xf32>
    %c0_i32 = arith.constant 0 : i32
    %10 = arith.cmpi eq, %arg1, %c0_i32 : i32
    %11 = arith.extui %10 : i1 to i32
    %c0_i32_9 = arith.constant 0 : i32
    %12 = arith.cmpi ne, %11, %c0_i32_9 : i32
    scf.if %12 {
      %c0_14 = arith.constant 0 : index
      %c0_15 = arith.constant 0 : index
      %19 = vector.load %arg6[%c0_14, %c0_15] : memref<1x128xf32, #tpu.memory_space<vmem>>, vector<1x128xf32>
      %20 = vector.broadcast %19 : vector<1x128xf32> to vector<16x128xf32>
      %21 = arith.addf %9, %20 : vector<16x128xf32>
      %c0_16 = arith.constant 0 : index
      %c0_17 = arith.constant 0 : index
      %22 = vector.load %arg8[%c0_16, %c0_17] : memref<16x128xf32, #tpu.memory_space<vmem>>, vector<16x128xf32>
      tpu.vector_store %arg8[%c0_16, %c0_17], %21 {strides = array<i32>} : memref<16x128xf32, #tpu.memory_space<vmem>>, vector<16x128xf32>,
    } else {
    }
    %c0_i32_10 = arith.constant 0 : i32
    %13 = arith.cmpi sgt, %arg1, %c0_i32_10 : i32
    %14 = arith.extui %13 : i1 to i32
    %c0_i32_11 = arith.constant 0 : i32
    %15 = arith.cmpi ne, %14, %c0_i32_11 : i32
    scf.if %15 {
      %c0_14 = arith.constant 0 : index
      %c0_15 = arith.constant 0 : index
      %19 = vector.load %arg8[%c0_14, %c0_15] : memref<16x128xf32, #tpu.memory_space<vmem>>, vector<16x128xf32>
      %20 = arith.addf %19, %9 : vector<16x128xf32>
      %c0_16 = arith.constant 0 : index
      %c0_17 = arith.constant 0 : index
      %21 = vector.load %arg8[%c0_16, %c0_17] : memref<16x128xf32, #tpu.memory_space<vmem>>, vector<16x128xf32>
      tpu.vector_store %arg8[%c0_16, %c0_17], %20 {strides = array<i32>} : memref<16x128xf32, #tpu.memory_space<vmem>>, vector<16x128xf32>,
    } else {
    }
    %c0_i32_12 = arith.constant 0 : i32
    %16 = arith.cmpi eq, %arg1, %c0_i32_12 : i32
    %17 = arith.extui %16 : i1 to i32
    %c0_i32_13 = arith.constant 0 : i32
    %18 = arith.cmpi ne, %17, %c0_i32_13 : i32
    scf.if %18 {
      %c0_14 = arith.constant 0 : index
      %c0_15 = arith.constant 0 : index
      %19 = vector.load %arg8[%c0_14, %c0_15] : memref<16x128xf32, #tpu.memory_space<vmem>>, vector<16x128xf32>
      %c0_16 = arith.constant 0 : index
      %c0_17 = arith.constant 0 : index
      %20 = vector.load %arg7[%c0_16, %c0_17] : memref<16x128xf32, #tpu.memory_space<vmem>>, vector<16x128xf32>
      tpu.vector_store %arg7[%c0_16, %c0_17], %19 {strides = array<i32>} : memref<16x128xf32, #tpu.memory_space<vmem>>, vector<16x128xf32>,
    } else {
    }
    return
  }
  func.func @transform_0(%arg0: i32, %arg1: i32) -> (i32, i32) {
    %c0_i32 = arith.constant 0 : i32
    %c0_i32_0 = arith.constant 0 : i32
    return %arg0, %c0_i32 : i32, i32
  }
  func.func @transform_1(%arg0: i32, %arg1: i32) -> (i32, i32) {
    %c0_i32 = arith.constant 0 : i32
    %c0_i32_0 = arith.constant 0 : i32
    return %c0_i32, %arg1 : i32, i32
  }
  func.func @transform_2(%arg0: i32, %arg1: i32) -> (i32, i32) {
    %c0_i32 = arith.constant 0 : i32
    %c0_i32_0 = arith.constant 0 : i32
    return %c0_i32, %arg1 : i32, i32
  }
  func.func @transform_3(%arg0: i32, %arg1: i32) -> (i32, i32) {
    %c0_i32 = arith.constant 0 : i32
    %c0_i32_0 = arith.constant 0 : i32
    return %arg1, %c0_i32 : i32, i32
  }
  func.func @transform_4(%arg0: i32, %arg1: i32) -> (i32, i32) {
    %c0_i32 = arith.constant 0 : i32
    %c0_i32_0 = arith.constant 0 : i32
    %c0_i32_1 = arith.constant 0 : i32
    return %c0_i32, %c0_i32_0 : i32, i32
  }
  func.func @transform_5(%arg0: i32, %arg1: i32) -> (i32, i32) {
    %c0_i32 = arith.constant 0 : i32
    %c0_i32_0 = arith.constant 0 : i32
    return %arg0, %c0_i32 : i32, i32
  }
}

</mosaic_0001>

<llo_original>
// kernel: tpu_custom_call.1
$region0: #{tpu_custom_call.1}
  #allocation0 [shape = 'u32[]', space=smem, size = 0x4, offset = 0x4, fixed_abs, tag = 'smem constant byte address 0x4 - core index']
  #allocation1 [shape = 'u32[144,128]{1,0:T(1,128)}', space=vmem, size = 0x12000, scoped, tag = 'internal scratch']
  #allocation2 [shape = 'f32[16,128]{1,0:T(8,128)}', space=vmem, size = 0x2000, scoped, tag = 'scratch operand']
  %s0 = inlined_call_operand.hbm [shape: f32[16,128], index: 0, kind: input, shape index: {}]
  %s1 = inlined_call_operand.hbm [shape: f32[128,256], index: 1, kind: input, shape index: {}]
  %s2 = inlined_call_operand.vmem [shape: f32[1,256], index: 2, kind: input, shape index: {}]
  %s3 = inlined_call_operand.hbm [shape: f32[256,128], index: 3, kind: input, shape index: {}]
  %s4 = inlined_call_operand.vmem [shape: f32[1,128], index: 4, kind: input, shape index: {}]
  %s5 = inlined_call_operand.hbm [shape: f32[16,128], index: 5, kind: output, shape index: {}]
  %s6 = sld [smem:[#allocation0]]
  $region54: #{tpu_custom_call.1} parent=0
    _
  %s8 = ssub.s32 1, %s6
  %s9 = scalar_select 0, %s8, %s6
  $region1: #{tpu_custom_call.1} parent=0
    #allocation3 [shape = 'u8[8192]{0}', space=vmem, size = 0x2000, scoped, tag = 'input window, operand 0, single buffered']
    #allocation4 [shape = 's32[1]{0}', space=sflag, size = 0x4, scoped, tag = 'scoped memory for tpu_custom_call.1']
    #allocation5 [shape = 's32[1]{0}', space=sflag, size = 0x4, scoped, tag = 'scoped memory for tpu_custom_call.1']
    #allocation6 [shape = 'u8[131072]{0}', space=vmem, size = 0x20000, scoped, tag = 'input window, operand 1, single buffered']
    #allocation7 [shape = 's32[1]{0}', space=sflag, size = 0x4, scoped, tag = 'scoped memory for tpu_custom_call.1']
    #allocation8 [shape = 'u8[131072]{0}', space=vmem, size = 0x20000, scoped, tag = 'input window, operand 3, single buffered']
    #allocation9 [shape = 'u8[8192]{0}', space=vmem, size = 0x2000, scoped, tag = 'output window, operand 0, single buffered']
    %10 = vsyncpa [#allocation4], 0
    %11 = vsyncpa [#allocation7], 0
    %12 = vsyncpa [#allocation5], 0
    // Predicated region
    $region2: #{tpu_custom_call.1} parent=1 // pred_check
      _
    $region3: #{tpu_custom_call.1} parent=1 // pred_check_branch
      %14 = sbr.rel (0) target = $region5
    $region4: #{tpu_custom_call.1} parent=1 // pred_region
      %s16 = ssub.s32 256, 256
      %17 = vsyncadd [#allocation4], %s16
      %s18 = sshll.u32 [#allocation3], 4
      %s19 = int_to_ptr.vmem [resolvable:$true] %s18
      %24 = dma.hbm_to_vmem [thread:$0]  %s0, 256, %s19, [#allocation4], 128, 128, 8
    $region5: #{tpu_custom_call.1} parent=1 // pred_fallthru
      _
    // Predicated region
    $region6: #{tpu_custom_call.1} parent=1 // pred_check
      _
    $region7: #{tpu_custom_call.1} parent=1 // pred_check_branch
      %26 = sbr.rel (0) target = $region9
    $region8: #{tpu_custom_call.1} parent=1 // pred_region
      %s28 = ssub.s32 4096, 4096
      %29 = vsyncadd [#allocation7], %s28
      %s30 = sshll.u32 [#allocation6], 4
      %s31 = int_to_ptr.vmem [resolvable:$true] %s30
      %36 = dma.hbm_to_vmem [thread:$0]  %s1, 4096, %s31, [#allocation7], 256, 256, 16
    $region9: #{tpu_custom_call.1} parent=1 // pred_fallthru
      _
    // Predicated region
    $region10: #{tpu_custom_call.1} parent=1 // pred_check
      _
    $region11: #{tpu_custom_call.1} parent=1 // pred_check_branch
      %38 = sbr.rel (0) target = $region13
    $region12: #{tpu_custom_call.1} parent=1 // pred_region
      _
    $region13: #{tpu_custom_call.1} parent=1 // pred_fallthru
      _
    // Predicated region
    $region14: #{tpu_custom_call.1} parent=1 // pred_check
      _
    $region15: #{tpu_custom_call.1} parent=1 // pred_check_branch
      %40 = sbr.rel (0) target = $region17
    $region16: #{tpu_custom_call.1} parent=1 // pred_region
      %s42 = ssub.s32 4096, 4096
      %43 = vsyncadd [#allocation7], %s42
      %s44 = sshll.u32 [#allocation8], 4
      %s45 = int_to_ptr.vmem [resolvable:$true] %s44
      %50 = dma.hbm_to_vmem [thread:$0]  %s3, 4096, %s45, [#allocation7], 128, 128, 8
    $region17: #{tpu_custom_call.1} parent=1 // pred_fallthru
      _
    // Predicated region
    $region18: #{tpu_custom_call.1} parent=1 // pred_check
      _
    $region19: #{tpu_custom_call.1} parent=1 // pred_check_branch
      %52 = sbr.rel (0) target = $region21
    $region20: #{tpu_custom_call.1} parent=1 // pred_region
      _
    $region21: #{tpu_custom_call.1} parent=1 // pred_fallthru
      _
    // Predicated region
    $region22: #{tpu_custom_call.1} parent=1 // pred_check
      _
    $region23: #{tpu_custom_call.1} parent=1 // pred_check_branch
      %54 = sbr.rel (0) target = $region25
    $region24: #{tpu_custom_call.1} parent=1 // pred_region
      %55 = dma.done [#allocation4], 256
    $region25: #{tpu_custom_call.1} parent=1 // pred_fallthru
      _
    // Predicated region
    $region26: #{tpu_custom_call.1} parent=1 // pred_check
      _
    $region27: #{tpu_custom_call.1} parent=1 // pred_check_branch
      %57 = sbr.rel (0) target = $region29
    $region28: #{tpu_custom_call.1} parent=1 // pred_region
      %58 = dma.done [#allocation7], 4096
    $region29: #{tpu_custom_call.1} parent=1 // pred_fallthru
      _
    // Predicated region
    $region30: #{tpu_custom_call.1} parent=1 // pred_check
      _
    $region31: #{tpu_custom_call.1} parent=1 // pred_check_branch
      %60 = sbr.rel (0) target = $region33
    $region32: #{tpu_custom_call.1} parent=1 // pred_region
      %61 = dma.done [#allocation7], 4096
    $region33: #{tpu_custom_call.1} parent=1 // pred_fallthru
      _
    %v62 = vld [vmem:[#allocation3] sm:$0xff]
    %v63 = vld [vmem:[#allocation3 + $0x8] sm:$0xff]
    %v64 = vld [vmem:[#allocation6] sm:$0xff]
    %v65 = vld [vmem:[#allocation6 + $0x8] sm:$0xff]
    %v66 = vld [vmem:[#allocation6 + $0x10] sm:$0xff]
    %v67 = vld [vmem:[#allocation6 + $0x18] sm:$0xff]
    %v68 = vld [vmem:[#allocation6 + $0x20] sm:$0xff]
    %v69 = vld [vmem:[#allocation6 + $0x28] sm:$0xff]
    %v70 = vld [vmem:[#allocation6 + $0x30] sm:$0xff]
    %v71 = vld [vmem:[#allocation6 + $0x38] sm:$0xff]
    %v72 = vld [vmem:[#allocation6 + $0x40] sm:$0xff]
    %v73 = vld [vmem:[#allocation6 + $0x48] sm:$0xff]
    %v74 = vld [vmem:[#allocation6 + $0x50] sm:$0xff]
    %v75 = vld [vmem:[#allocation6 + $0x58] sm:$0xff]
    %v76 = vld [vmem:[#allocation6 + $0x60] sm:$0xff]
    %v77 = vld [vmem:[#allocation6 + $0x68] sm:$0xff]
    %v78 = vld [vmem:[#allocation6 + $0x70] sm:$0xff]
    %v79 = vld [vmem:[#allocation6 + $0x78] sm:$0xff]
    %v80 = vld [vmem:[#allocation6 + $0x80] sm:$0xff]
    %v81 = vld [vmem:[#allocation6 + $0x88] sm:$0xff]
    %v82 = vld [vmem:[#allocation6 + $0x90] sm:$0xff]
    %v83 = vld [vmem:[#allocation6 + $0x98] sm:$0xff]
    %v84 = vld [vmem:[#allocation6 + $0xa0] sm:$0xff]
    %v85 = vld [vmem:[#allocation6 + $0xa8] sm:$0xff]
    %v86 = vld [vmem:[#allocation6 + $0xb0] sm:$0xff]
    %v87 = vld [vmem:[#allocation6 + $0xb8] sm:$0xff]
    %v88 = vld [vmem:[#allocation6 + $0xc0] sm:$0xff]
    %v89 = vld [vmem:[#allocation6 + $0xc8] sm:$0xff]
    %v90 = vld [vmem:[#allocation6 + $0xd0] sm:$0xff]
    %v91 = vld [vmem:[#allocation6 + $0xd8] sm:$0xff]
    %v92 = vld [vmem:[#allocation6 + $0xe0] sm:$0xff]
    %v93 = vld [vmem:[#allocation6 + $0xe8] sm:$0xff]
    %v94 = vld [vmem:[#allocation6 + $0xf0] sm:$0xff]
    %v95 = vld [vmem:[#allocation6 + $0xf8] sm:$0xff]
    %v96 = vld [vmem:[%s2] sm:$0x3]
    %v98 = vlaneseq
    %v99 = vshrl.u32 %v98, 7
    %v100 = vsub.s32 0, %v99
    %v101 = vrot.slane %v96, %v100
    %v102 = vlaneseq
    %v103 = vshrl.u32 %v102, 7
    %v104 = vsub.s32 1, %v103
    %v105 = vrot.slane %v96, %v104
    %108 = vmatprep.subr.mxu0 %v65
    %109 = vmatpush1.msra.mxu0 %v64
    %110 = vmatprep.subr.mxu0 %v67
    %111 = vmatpush1.msra.mxu0 %v66
    %112 = vmatprep.subr.mxu0 %v69
    %113 = vmatpush1.msra.mxu0 %v68
    %114 = vmatprep.subr.mxu0 %v71
    %115 = vmatpush1.msra.mxu0 %v70
    %116 = vmatprep.subr.mxu0 %v73
    %117 = vmatpush1.msra.mxu0 %v72
    %118 = vmatprep.subr.mxu0 %v75
    %119 = vmatpush1.msra.mxu0 %v74
    %120 = vmatprep.subr.mxu0 %v77
    %121 = vmatpush1.msra.mxu0 %v76
    %122 = vmatprep.subr.mxu0 %v79
    %123 = vmatpush1.msra.mxu0 %v78
    %124 = vmatprep.subr.mxu0 %v81
    %125 = vmatpush1.msra.mxu0 %v80
    %126 = vmatprep.subr.mxu0 %v83
    %127 = vmatpush1.msra.mxu0 %v82
    %128 = vmatprep.subr.mxu0 %v85
    %129 = vmatpush1.msra.mxu0 %v84
    %130 = vmatprep.subr.mxu0 %v87
    %131 = vmatpush1.msra.mxu0 %v86
    %132 = vmatprep.subr.mxu0 %v89
    %133 = vmatpush1.msra.mxu0 %v88
    %134 = vmatprep.subr.mxu0 %v91
    %135 = vmatpush1.msra.mxu0 %v90
    %136 = vmatprep.subr.mxu0 %v93
    %137 = vmatpush1.msra.mxu0 %v92
    %138 = vmatprep.subr.mxu0 %v95
    %139 = vmatpush1.msra.mxu0 %v94
    %140 = vmatprep.subr.mxu0 0.0
    %141 = vmatpush1.msra.mxu0 0.0
    %142 = vmatprep.subr.mxu0 0.0
    %143 = vmatpush1.msra.mxu0 0.0
    %144 = vmatprep.subr.mxu0 0.0
    %145 = vmatpush1.msra.mxu0 0.0
    %146 = vmatprep.subr.mxu0 0.0
    %147 = vmatpush1.msra.mxu0 0.0
    %148 = vmatprep.subr.mxu0 0.0
    %149 = vmatpush1.msra.mxu0 0.0
    %150 = vmatprep.subr.mxu0 0.0
    %151 = vmatpush1.msra.mxu0 0.0
    %152 = vmatprep.subr.mxu0 0.0
    %153 = vmatpush1.msra.mxu0 0.0
    %154 = vmatprep.subr.mxu0 0.0
    %155 = vmatpush1.msra.mxu0 0.0
    %156 = vmatprep.subr.mxu0 0.0
    %157 = vmatpush1.msra.mxu0 0.0
    %158 = vmatprep.subr.mxu0 0.0
    %159 = vmatpush1.msra.mxu0 0.0
    %160 = vmatprep.subr.mxu0 0.0
    %161 = vmatpush1.msra.mxu0 0.0
    %162 = vmatprep.subr.mxu0 0.0
    %163 = vmatpush1.msra.mxu0 0.0
    %164 = vmatprep.subr.mxu0 0.0
    %165 = vmatpush1.msra.mxu0 0.0
    %166 = vmatprep.subr.mxu0 0.0
    %167 = vmatpush1.msra.mxu0 0.0
    %168 = vmatprep.subr.mxu0 0.0
    %169 = vmatpush1.msra.mxu0 0.0
    %170 = vmatprep.subr.mxu0 0.0
    %171 = vmatpush1.msra.mxu0 0.0
    %172 = vmatprep.mubr.f32.mxu0 0.0
    %173 = vmatmul.mubr.f32.gmra.mrb[0].mxu0 %v62
    %v174 = vpop.f32.mrb[0].mxu0
    %v175 = vadd.f32 %v101, %v174
    %v176 = vpop.f32.mrb[0].mxu0
    %v177 = vadd.f32 %v105, %v176
    %178 = vmatprep.mubr.f32.mxu0 0.0
    %179 = vmatmul.mubr.f32.gmra.mrb[0].mxu0 %v63
    %v180 = vpop.f32.mrb[0].mxu0
    %v181 = vadd.f32 %v101, %v180
    %v182 = vpop.f32.mrb[0].mxu0
    %v183 = vadd.f32 %v105, %v182
    %184 = vdwg.mxu0
    %v185 = vmax.f32 %v175, 0.0
    %v186 = vmax.f32 %v177, 0.0
    %v187 = vmax.f32 %v181, 0.0
    %v188 = vmax.f32 %v183, 0.0
    %v189 = vld [vmem:[#allocation8] sm:$0xff]
    %v190 = vld [vmem:[#allocation8 + $0x8] sm:$0xff]
    %v191 = vld [vmem:[#allocation8 + $0x10] sm:$0xff]
    %v192 = vld [vmem:[#allocation8 + $0x18] sm:$0xff]
    %v193 = vld [vmem:[#allocation8 + $0x20] sm:$0xff]
    %v194 = vld [vmem:[#allocation8 + $0x28] sm:$0xff]
    %v195 = vld [vmem:[#allocation8 + $0x30] sm:$0xff]
    %v196 = vld [vmem:[#allocation8 + $0x38] sm:$0xff]
    %v197 = vld [vmem:[#allocation8 + $0x40] sm:$0xff]
    %v198 = vld [vmem:[#allocation8 + $0x48] sm:$0xff]
    %v199 = vld [vmem:[#allocation8 + $0x50] sm:$0xff]
    %v200 = vld [vmem:[#allocation8 + $0x58] sm:$0xff]
    %v201 = vld [vmem:[#allocation8 + $0x60] sm:$0xff]
    %v202 = vld [vmem:[#allocation8 + $0x68] sm:$0xff]
    %v203 = vld [vmem:[#allocation8 + $0x70] sm:$0xff]
    %v204 = vld [vmem:[#allocation8 + $0x78] sm:$0xff]
    %v205 = vld [vmem:[#allocation8 + $0x80] sm:$0xff]
    %v206 = vld [vmem:[#allocation8 + $0x88] sm:$0xff]
    %v207 = vld [vmem:[#allocation8 + $0x90] sm:$0xff]
    %v208 = vld [vmem:[#allocation8 + $0x98] sm:$0xff]
    %v209 = vld [vmem:[#allocation8 + $0xa0] sm:$0xff]
    %v210 = vld [vmem:[#allocation8 + $0xa8] sm:$0xff]
    %v211 = vld [vmem:[#allocation8 + $0xb0] sm:$0xff]
    %v212 = vld [vmem:[#allocation8 + $0xb8] sm:$0xff]
    %v213 = vld [vmem:[#allocation8 + $0xc0] sm:$0xff]
    %v214 = vld [vmem:[#allocation8 + $0xc8] sm:$0xff]
    %v215 = vld [vmem:[#allocation8 + $0xd0] sm:$0xff]
    %v216 = vld [vmem:[#allocation8 + $0xd8] sm:$0xff]
    %v217 = vld [vmem:[#allocation8 + $0xe0] sm:$0xff]
    %v218 = vld [vmem:[#allocation8 + $0xe8] sm:$0xff]
    %v219 = vld [vmem:[#allocation8 + $0xf0] sm:$0xff]
    %v220 = vld [vmem:[#allocation8 + $0xf8] sm:$0xff]
    %221 = vmatprep.subr.mxu0 0.0
    %222 = vmatpush1.msra.mxu0 %v189
    %223 = vmatprep.subr.mxu0 0.0
    %224 = vmatpush1.msra.mxu0 %v190
    %225 = vmatprep.subr.mxu0 0.0
    %226 = vmatpush1.msra.mxu0 %v191
    %227 = vmatprep.subr.mxu0 0.0
    %228 = vmatpush1.msra.mxu0 %v192
    %229 = vmatprep.subr.mxu0 0.0
    %230 = vmatpush1.msra.mxu0 %v193
    %231 = vmatprep.subr.mxu0 0.0
    %232 = vmatpush1.msra.mxu0 %v194
    %233 = vmatprep.subr.mxu0 0.0
    %234 = vmatpush1.msra.mxu0 %v195
    %235 = vmatprep.subr.mxu0 0.0
    %236 = vmatpush1.msra.mxu0 %v196
    %237 = vmatprep.subr.mxu0 0.0
    %238 = vmatpush1.msra.mxu0 %v197
    %239 = vmatprep.subr.mxu0 0.0
    %240 = vmatpush1.msra.mxu0 %v198
    %241 = vmatprep.subr.mxu0 0.0
    %242 = vmatpush1.msra.mxu0 %v199
    %243 = vmatprep.subr.mxu0 0.0
    %244 = vmatpush1.msra.mxu0 %v200
    %245 = vmatprep.subr.mxu0 0.0
    %246 = vmatpush1.msra.mxu0 %v201
    %247 = vmatprep.subr.mxu0 0.0
    %248 = vmatpush1.msra.mxu0 %v202
    %249 = vmatprep.subr.mxu0 0.0
    %250 = vmatpush1.msra.mxu0 %v203
    %251 = vmatprep.subr.mxu0 0.0
    %252 = vmatpush1.msra.mxu0 %v204
    %253 = vmatprep.subr.mxu0 0.0
    %254 = vmatpush1.msra.mxu0 %v205
    %255 = vmatprep.subr.mxu0 0.0
    %256 = vmatpush1.msra.mxu0 %v206
    %257 = vmatprep.subr.mxu0 0.0
    %258 = vmatpush1.msra.mxu0 %v207
    %259 = vmatprep.subr.mxu0 0.0
    %260 = vmatpush1.msra.mxu0 %v208
    %261 = vmatprep.subr.mxu0 0.0
    %262 = vmatpush1.msra.mxu0 %v209
    %263 = vmatprep.subr.mxu0 0.0
    %264 = vmatpush1.msra.mxu0 %v210
    %265 = vmatprep.subr.mxu0 0.0
    %266 = vmatpush1.msra.mxu0 %v211
    %267 = vmatprep.subr.mxu0 0.0
    %268 = vmatpush1.msra.mxu0 %v212
    %269 = vmatprep.subr.mxu0 0.0
    %270 = vmatpush1.msra.mxu0 %v213
    %271 = vmatprep.subr.mxu0 0.0
    %272 = vmatpush1.msra.mxu0 %v214
    %273 = vmatprep.subr.mxu0 0.0
    %274 = vmatpush1.msra.mxu0 %v215
    %275 = vmatprep.subr.mxu0 0.0
    %276 = vmatpush1.msra.mxu0 %v216
    %277 = vmatprep.subr.mxu0 0.0
    %278 = vmatpush1.msra.mxu0 %v217
    %279 = vmatprep.subr.mxu0 0.0
    %280 = vmatpush1.msra.mxu0 %v218
    %281 = vmatprep.subr.mxu0 0.0
    %282 = vmatpush1.msra.mxu0 %v219
    %283 = vmatprep.subr.mxu0 0.0
    %284 = vmatpush1.msra.mxu0 %v220
    %285 = vmatprep.mubr.f32.mxu0 %v186
    %286 = vmatmul.mubr.f32.gmra.mrb[0].mxu0 %v185
    %v287 = vpop.f32.mrb[0].mxu0
    %v288 = vadd.f32 0.0, %v287
    %v289 = vpop.f32.mrb[0].mxu0
    %290 = vmatprep.mubr.f32.mxu0 %v188
    %291 = vmatmul.mubr.f32.gmra.mrb[0].mxu0 %v187
    %v292 = vpop.f32.mrb[0].mxu0
    %v293 = vadd.f32 0.0, %v292
    %v294 = vpop.f32.mrb[0].mxu0
    %295 = vdwg.mxu0
    %p296 = scmp.eq.s32.totalorder 0, 0
    // Predicated region
    $region34: #{tpu_custom_call.1} parent=1 // pred_check
      %p297 = pneg %p296
    $region35: #{tpu_custom_call.1} parent=1 // pred_check_branch
      %299 = sbr.rel (%p297) target = $region37
    $region36: #{tpu_custom_call.1} parent=1 // pred_region
      %v300 = vld [vmem:[%s4] sm:$0x1]
      %v302 = vlaneseq
      %v303 = vshrl.u32 %v302, 7
      %v304 = vsub.s32 0, %v303
      %v305 = vrot.slane %v300, %v304
      %v307 = vadd.f32 %v288, %v305
      %v308 = vadd.f32 %v293, %v305
      %309 = vst [vmem:[#allocation2] sm:$0xff] %v307
      %310 = vst [vmem:[#allocation2 + $0x8] sm:$0xff] %v308
    $region37: #{tpu_custom_call.1} parent=1 // pred_fallthru
      _
    %p311 = scmp.gt.s32.totalorder 0, 0
    // Predicated region
    $region38: #{tpu_custom_call.1} parent=1 // pred_check
      %p312 = pneg %p311
    $region39: #{tpu_custom_call.1} parent=1 // pred_check_branch
      %314 = sbr.rel (%p312) target = $region41
    $region40: #{tpu_custom_call.1} parent=1 // pred_region
      %v315 = vld [vmem:[#allocation2] sm:$0xff]
      %v316 = vld [vmem:[#allocation2 + $0x8] sm:$0xff]
      %v317 = vadd.f32 %v315, %v288
      %v318 = vadd.f32 %v316, %v293
      %319 = vst [vmem:[#allocation2] sm:$0xff] %v317
      %320 = vst [vmem:[#allocation2 + $0x8] sm:$0xff] %v318
    $region41: #{tpu_custom_call.1} parent=1 // pred_fallthru
      _
    // Predicated region
    $region42: #{tpu_custom_call.1} parent=1 // pred_check
      %p321 = pneg %p296
    $region43: #{tpu_custom_call.1} parent=1 // pred_check_branch
      %323 = sbr.rel (%p321) target = $region45
    $region44: #{tpu_custom_call.1} parent=1 // pred_region
      %v324 = vld [vmem:[#allocation2] sm:$0xff]
      %v325 = vld [vmem:[#allocation2 + $0x8] sm:$0xff]
      %326 = vst [vmem:[#allocation9] sm:$0xff] %v324
      %327 = vst [vmem:[#allocation9 + $0x8] sm:$0xff] %v325
    $region45: #{tpu_custom_call.1} parent=1 // pred_fallthru
      _
    // Predicated region
    $region46: #{tpu_custom_call.1} parent=1 // pred_check
      _
    $region47: #{tpu_custom_call.1} parent=1 // pred_check_branch
      %329 = sbr.rel (0) target = $region49
    $region48: #{tpu_custom_call.1} parent=1 // pred_region
      %s331 = ssub.s32 256, 256
      %332 = vsyncadd [#allocation5], %s331
      %s333 = sshll.u32 [#allocation9], 4
      %s334 = int_to_ptr.vmem [resolvable:$true] %s333
      %339 = dma.vmem_to_hbm [thread:$0]  %s334, 256, %s5, [#allocation5], 128, 128, 8
    $region49: #{tpu_custom_call.1} parent=1 // pred_fallthru
      _
    // Predicated region
    $region50: #{tpu_custom_call.1} parent=1 // pred_check
      _
    $region51: #{tpu_custom_call.1} parent=1 // pred_check_branch
      %341 = sbr.rel (0) target = $region53
    $region52: #{tpu_custom_call.1} parent=1 // pred_region
      %342 = dma.done [#allocation5], 256
    $region53: #{tpu_custom_call.1} parent=1 // pred_fallthru
      _
    %343 = vsyncpa [#allocation4], 1
    %344 = vsyncpa [#allocation7], 1
    %345 = vsyncpa [#allocation5], 1

</llo_original>
